<compile_context>
chip_gen: v5e
topology: v5e:2x2
jax: 0.10.0
libtpu: 0.0.40
codegen_flags: <defaults>
</compile_context>

<pallas_src>
import functools
import math

import jax
import jax.numpy as jnp
from jax import lax
from jax.experimental import pallas as pl
from jax.experimental.pallas import tpu as pltpu

_VMEM_LIMIT = 64 * 1024 * 1024  # explicit scoped-VMEM budget (fits all gens)


# ----------------------------------------------------------------------------
# helpers
# ----------------------------------------------------------------------------
def _pick_tile(dim, target, base):
    """Largest tile <= target that divides `dim` and is a multiple of `base`
    (falls back to the full dim for small / awkward sizes)."""
    if dim <= target:
        return dim
    t = (target // base) * base
    while t >= base:
        if dim % t == 0:
            return t
        t -= base
    return dim


# ----------------------------------------------------------------------------
# Kernel 1: tiled linear projection  o = x @ w + b
# ----------------------------------------------------------------------------
def matmul_bias_kernel(x_ref, w_ref, b_ref, o_ref, acc_ref):
    k = pl.program_id(2)

    @pl.when(k == 0)
    def _():
        acc_ref[...] = jnp.zeros_like(acc_ref)

    acc_ref[...] += jnp.dot(x_ref[...], w_ref[...],
                            preferred_element_type=jnp.float32)

    @pl.when(k == pl.num_programs(2) - 1)
    def _():
        o_ref[...] = (acc_ref[...] + b_ref[...]).astype(o_ref.dtype)


def linear(x2d, w, b, *, tm=512, tn=512, tk=512):
    """x2d: (M, K), w: (K, N), b: (N,) -> (M, N)."""
    M, K = x2d.shape
    N = w.shape[1]
    tm = _pick_tile(M, tm, 8)
    tn = _pick_tile(N, tn, 128)
    tk = _pick_tile(K, tk, 128)
    b2d = b.reshape(1, N)
    grid = (M // tm, N // tn, K // tk)
    return pl.pallas_call(
        matmul_bias_kernel,
        out_shape=jax.ShapeDtypeStruct((M, N), x2d.dtype),
        grid=grid,
        in_specs=[
            pl.BlockSpec((tm, tk), lambda i, j, k: (i, k)),
            pl.BlockSpec((tk, tn), lambda i, j, k: (k, j)),
            pl.BlockSpec((1, tn), lambda i, j, k: (0, j)),
        ],
        out_specs=pl.BlockSpec((tm, tn), lambda i, j, k: (i, j)),
        scratch_shapes=[pltpu.VMEM((tm, tn), jnp.float32)],
        compiler_params=pltpu.CompilerParams(
            dimension_semantics=("parallel", "parallel", "arbitrary"),
            vmem_limit_bytes=_VMEM_LIMIT),
    )(x2d, w, b2d)


# ----------------------------------------------------------------------------
# Kernel 2: flash-style grouped-query attention with ALiBi bias.
# One grid step = all g query heads of one KV head (K/V loaded once).
#   packed=True : q_ref (tq, g*d),  o_ref (tq, g*d)   [head_dim % 128 == 0]
#   packed=False: q_ref (g, tq, d), o_ref (g, tq, d)  [small head_dim fallback]
#   k_ref/v_ref : (tk, d) in both cases.
# ----------------------------------------------------------------------------
def gqa_alibi_kernel(q_ref, k_ref, v_ref, o_ref,
                     m_sc, l_sc, acc_sc, dist_sc, *, packed):
    qi = pl.program_id(2)
    ki = pl.program_id(3)
    tk, d = k_ref.shape
    if packed:
        tq, gd = q_ref.shape
        g = gd // d
    else:
        g, tq, _ = q_ref.shape

    @pl.when(ki == 0)
    def _():
        m_sc[...] = jnp.full_like(m_sc, -jnp.inf)
        l_sc[...] = jnp.zeros_like(l_sc)
        acc_sc[...] = jnp.zeros_like(acc_sc)
        # relative-position base (key_col - query_row); the qi/ki dependent
        # part is a scalar offset added per step.
        rows = lax.broadcasted_iota(jnp.int32, (tq, tk), 0)
        cols = lax.broadcasted_iota(jnp.int32, (tq, tk), 1)
        dist_sc[...] = (cols - rows).astype(jnp.float32)

    k = k_ref[...]
    v = v_ref[...]
    off = (ki * tk - qi * tq).astype(jnp.float32)
    dist = jnp.abs(dist_sc[...] + off)          # |key_pos - query_pos|, shared

    for i in range(g):                           # static unroll over the group
        slope = 2.0 ** (-i / g)                  # ALiBi slope for head hk*g + i
        q_h = q_ref[:, i * d:(i + 1) * d] if packed else q_ref[i]   # (tq, d)
        # q @ k^T without an explicit transpose; native-dtype MXU operands.
        s = lax.dot_general(q_h, k, (((1,), (1,)), ((), ())),
                            preferred_element_type=jnp.float32)     # (tq, tk)
        s = s - slope * dist

        # online softmax update
        m_prev = m_sc[i]
        m_new = jnp.maximum(m_prev, s.max(axis=-1, keepdims=True))
        alpha = jnp.exp(m_prev - m_new)
        p = jnp.exp(s - m_new)
        l_sc[i] = alpha * l_sc[i] + p.sum(axis=-1, keepdims=True)
        acc_sc[i] = alpha * acc_sc[i] + jnp.dot(
            p.astype(v.dtype), v, preferred_element_type=jnp.float32)
        m_sc[i] = m_new

    @pl.when(ki == pl.num_programs(3) - 1)
    def _():
        for i in range(g):
            out_i = (acc_sc[i] *
                     pl.reciprocal(l_sc[i], approx=True)).astype(o_ref.dtype)
            if packed:
                o_ref[:, i * d:(i + 1) * d] = out_i
            else:
                o_ref[i] = out_i


def _attn_scratch(g, tq, tk, d):
    return [
        pltpu.VMEM((g, tq, 1), jnp.float32),   # running max
        pltpu.VMEM((g, tq, 1), jnp.float32),   # running denom
        pltpu.VMEM((g, tq, d), jnp.float32),   # running output accumulator
        pltpu.VMEM((tq, tk), jnp.float32),     # ALiBi relative-pos base
    ]


_ATTN_SEMANTICS = ("parallel", "parallel", "parallel", "arbitrary")


def gqa_attention_packed(qkv3, *, d_model, q_heads, kv_heads,
                         tq_target=512, tk_target=1024):
    """Transpose-free path (head_dim % 128 == 0).

    qkv3: (B, S, D + 2*d_kv) fused q/k/v activations -> (B, S, D) context."""
    B, S, _ = qkv3.shape
    d = d_model // q_heads
    assert d % 128 == 0
    g = q_heads // kv_heads
    gd = g * d
    HQ, HK = q_heads, kv_heads
    tq = _pick_tile(S, tq_target, 8)
    tk = _pick_tile(S, tk_target, 8)
    sq = pl.Squeezed()
    kernel = functools.partial(gqa_alibi_kernel, packed=True)
    return pl.pallas_call(
        kernel,
        out_shape=jax.ShapeDtypeStruct((B, S, d_model), qkv3.dtype),
        grid=(B, HK, S // tq, S // tk),
        in_specs=[
            # q: g heads of kv-head h -> columns [h*g*d, (h+1)*g*d)
            pl.BlockSpec((sq, tq, gd), lambda b, h, qi, ki: (b, qi, h)),
            # k: columns [D + h*d, D + (h+1)*d)
            pl.BlockSpec((sq, tk, d), lambda b, h, qi, ki: (b, ki, HQ + h)),
            # v: columns [D + d_kv + h*d, ...)
            pl.BlockSpec((sq, tk, d),
                         lambda b, h, qi, ki: (b, ki, HQ + HK + h)),
        ],
        out_specs=pl.BlockSpec((sq, tq, gd), lambda b, h, qi, ki: (b, qi, h)),
        scratch_shapes=_attn_scratch(g, tq, tk, d),
        compiler_params=pltpu.CompilerParams(
            dimension_semantics=_ATTN_SEMANTICS,
            vmem_limit_bytes=_VMEM_LIMIT),
    )(qkv3, qkv3, qkv3)


def gqa_attention_grouped(q, k, v, *, tq_target=512, tk_target=1024):
    """Fallback path for head_dim < 128 (head_dim is the full lane dim).

    q: (B, HK, g, S, d), k/v: (B, HK, S, d) -> (B, HK, g, S, d)."""
    B, HK, g, S, d = q.shape
    tq = _pick_tile(S, tq_target, 8)
    tk = _pick_tile(S, tk_target, 8)
    sq = pl.Squeezed()
    kernel = functools.partial(gqa_alibi_kernel, packed=False)
    return pl.pallas_call(
        kernel,
        out_shape=jax.ShapeDtypeStruct((B, HK, g, S, d), q.dtype),
        grid=(B, HK, S // tq, S // tk),
        in_specs=[
            pl.BlockSpec((sq, sq, g, tq, d),
                         lambda b, h, qi, ki: (b, h, 0, qi, 0)),
            pl.BlockSpec((sq, sq, tk, d), lambda b, h, qi, ki: (b, h, ki, 0)),
            pl.BlockSpec((sq, sq, tk, d), lambda b, h, qi, ki: (b, h, ki, 0)),
        ],
        out_specs=pl.BlockSpec((sq, sq, g, tq, d),
                               lambda b, h, qi, ki: (b, h, 0, qi, 0)),
        scratch_shapes=_attn_scratch(g, tq, tk, d),
        compiler_params=pltpu.CompilerParams(
            dimension_semantics=_ATTN_SEMANTICS,
            vmem_limit_bytes=_VMEM_LIMIT),
    )(q, k, v)


# ----------------------------------------------------------------------------
# GroupedQueryAttentionWithALiBi forward (glue in JAX, hot paths in Pallas)
# ----------------------------------------------------------------------------
def prepare_params(raw, *, q_heads):
    """Host-side, once: fuse q/k/v weights and fold 1/sqrt(head_dim) into wq/bq."""
    D = raw["wq"].shape[0]
    d = D // q_heads
    scale = 1.0 / math.sqrt(d)
    return {
        "w_qkv": jnp.concatenate([raw["wq"] * scale, raw["wk"], raw["wv"]],
                                 axis=1),
        "b_qkv": jnp.concatenate([raw["bq"] * scale, raw["bk"], raw["bv"]],
                                 axis=0),
        "wo": raw["wo"],
        "bo": jnp.zeros((raw["wo"].shape[1],), raw["wo"].dtype),  # no bias
    }


def gqa_alibi_forward(params, hidden_states, *, q_heads, kv_heads,
                      attn_tq=512, attn_tk=1024):
    """hidden_states: (B, S, d_model) -> (B, S, d_model)."""
    B, S, D = hidden_states.shape
    d = D // q_heads
    g = q_heads // kv_heads
    d_kv = d * kv_heads

    # fused q/k/v projection: single pass over the activations
    x2d = hidden_states.reshape(B * S, D)
    qkv = linear(x2d, params["w_qkv"], params["b_qkv"])   # (B*S, D + 2*d_kv)

    if d % 128 == 0:
        # transpose-free: attention reads/writes (B, S, features) directly
        qkv3 = qkv.reshape(B, S, D + 2 * d_kv)
        ctx = gqa_attention_packed(qkv3, d_model=D, q_heads=q_heads,
                                   kv_heads=kv_heads,
                                   tq_target=attn_tq, tk_target=attn_tk)
        ctx2d = ctx.reshape(B * S, D)
    else:
        # head_dim < 128: keep head_dim as the full lane dim (needs transposes)
        q = qkv[:, :D].reshape(B, S, kv_heads, g, d).transpose(0, 2, 3, 1, 4)
        k = qkv[:, D:D + d_kv].reshape(B, S, kv_heads, d).transpose(0, 2, 1, 3)
        v = qkv[:, D + d_kv:].reshape(B, S, kv_heads, d).transpose(0, 2, 1, 3)
        ctx = gqa_attention_grouped(q, k, v,
                                    tq_target=attn_tq, tk_target=attn_tk)
        ctx2d = ctx.transpose(0, 3, 1, 2, 4).reshape(B * S, D)

    out = linear(ctx2d, params["wo"], params["bo"])       # out_proj (no bias)
    return out.reshape(B, S, D)


def init_params(key, d_model, q_heads, kv_heads):
    """PyTorch nn.Linear default init, weights stored as (in, out)."""
    d = d_model // q_heads
    d_kv = d * kv_heads
    keys = jax.random.split(key, 7)
    bound = 1.0 / math.sqrt(d_model)

    def u(kk, shape):
        return jax.random.uniform(kk, shape, jnp.float32, -bound, bound)

    return {
        "wq": u(keys[0], (d_model, d_model)), "bq": u(keys[1], (d_model,)),
        "wk": u(keys[2], (d_model, d_kv)),    "bk": u(keys[3], (d_kv,)),
        "wv": u(keys[4], (d_model, d_kv)),    "bv": u(keys[5], (d_kv,)),
        "wo": u(keys[6], (d_model, d_model)),  # out_proj: bias=False
    }


# ----------------------------------------------------------------------------
# pure-JAX reference (mirrors the PyTorch scaled_dot_product_gqa exactly)
# ----------------------------------------------------------------------------
def ref_forward(raw, x, q_heads, kv_heads):
    B, S, D = x.shape
    d = D // q_heads
    g = q_heads // kv_heads
    x2d = x.reshape(B * S, D)
    q = (x2d @ raw["wq"] + raw["bq"]).reshape(B, S, q_heads, d)
    k = (x2d @ raw["wk"] + raw["bk"]).reshape(B, S, kv_heads, d)
    v = (x2d @ raw["wv"] + raw["bv"]).reshape(B, S, kv_heads, d)
    q = q.transpose(0, 2, 1, 3) / math.sqrt(d)          # (B, HQ, S, d)
    k = k.transpose(0, 2, 1, 3)
    v = v.transpose(0, 2, 1, 3)
    # 'b (h g) n d -> b g h n d'
    qg = q.reshape(B, kv_heads, g, S, d).transpose(0, 2, 1, 3, 4)
    sim = jnp.einsum("bghnd,bhsd->bghns", qg, k)
    rel = -jnp.abs(jnp.arange(S)[None, :]
                   - jnp.arange(S)[:, None]).astype(jnp.float32)
    slopes = (2.0 ** (-jnp.arange(g, dtype=jnp.float32) / g)
              ).reshape(1, g, 1, 1, 1)
    sim = sim + slopes * rel[None, None, None, :, :]
    attn = jax.nn.softmax(sim, axis=-1)
    out = jnp.einsum("bghns,bhsd->bghnd", attn, v)
    # 'b g h n d -> b n (h g) d'
    out = out.transpose(0, 3, 2, 1, 4).reshape(B * S, D)
    return (out @ raw["wo"]).reshape(B, S, D)


if __name__ == "__main__":
    key = jax.random.PRNGKey(0)

    # standalone check of the tiled matmul (exercises the multi-step K loop)
    kx, kw, kb, key = jax.random.split(key, 4)
    xm = jax.random.normal(kx, (64, 1024), jnp.float32)
    wm = jax.random.normal(kw, (1024, 256), jnp.float32) * 0.03
    bm = jax.random.normal(kb, (256,), jnp.float32)
    om = jax.block_until_ready(linear(xm, wm, bm))
    assert jnp.allclose(om, xm @ wm + bm, atol=2e-3, rtol=2e-3)

    configs = [
        # (B, S, d_model, q_heads, kv_heads)
        (2, 32, 256, 2, 1),   # head_dim=128 -> packed (transpose-free) path
        (2, 24, 512, 4, 2),   # head_dim=128, multiple kv heads
        (2, 16, 32, 4, 2),    # head_dim=8  -> fallback path
    ]
    for (B, S, d_model, q_heads, kv_heads) in configs:
        kp, kx, key = jax.random.split(key, 3)
        raw = init_params(kp, d_model, q_heads, kv_heads)
        params = prepare_params(raw, q_heads=q_heads)
        x = jax.random.normal(kx, (B, S, d_model), jnp.float32)

        # small attention tiles so the online-softmax ki loop is exercised
        out = gqa_alibi_forward(params, x, q_heads=q_heads,
                                kv_heads=kv_heads, attn_tq=8, attn_tk=8)
        out = jax.block_until_ready(out)

        ref = ref_forward(raw, x, q_heads, kv_heads)
        assert out.shape == (B, S, d_model)
        err = float(jnp.max(jnp.abs(out - ref)))
        assert jnp.allclose(out, ref, atol=2e-3, rtol=2e-3), (
            f"config {(B, S, d_model, q_heads, kv_heads)}: max abs err {err}")

    print("KERNEL_OK")
</pallas_src>

<mosaic_0001>
module attributes {stable_mosaic.version = 11 : i64} {
  func.func @matmul_bias_kernel(%arg0: i32, %arg1: i32, %arg2: i32, %arg3: memref<64x512xf32, #tpu.memory_space<vmem>>, %arg4: memref<512x256xf32, #tpu.memory_space<vmem>>, %arg5: memref<1x256xf32, #tpu.memory_space<vmem>>, %arg6: memref<64x256xf32, #tpu.memory_space<vmem>>, %arg7: memref<64x256xf32, #tpu.memory_space<vmem>>) attributes {dimension_semantics = [#tpu.dimension_semantics<parallel>, #tpu.dimension_semantics<parallel>, #tpu.dimension_semantics<arbitrary>], iteration_bounds = array<i64: 1, 1, 2>, scalar_prefetch = 0 : i64, scratch_operands = 1 : i64, tpu.core_type = #tpu.core_type<tc>, window_params = [{transform_indices = @transform_0, window_bounds = array<i64: 64, 512>}, {transform_indices = @transform_1, window_bounds = array<i64: 512, 256>}, {transform_indices = @transform_2, window_bounds = array<i64: 1, 256>}, {transform_indices = @transform_3, window_bounds = array<i64: 64, 256>}]} {
    %c0_i32 = arith.constant 0 : i32
    %0 = arith.cmpi eq, %arg2, %c0_i32 : i32
    %1 = arith.extui %0 : i1 to i32
    %c0_i32_0 = arith.constant 0 : i32
    %2 = arith.cmpi ne, %1, %c0_i32_0 : i32
    scf.if %2 {
      %cst_9 = arith.constant 0.000000e+00 : f32
      %12 = vector.broadcast %cst_9 : f32 to vector<64x256xf32>
      %c0_10 = arith.constant 0 : index
      %c0_11 = arith.constant 0 : index
      %13 = vector.load %arg7[%c0_10, %c0_11] : memref<64x256xf32, #tpu.memory_space<vmem>>, vector<64x256xf32>
      tpu.vector_store %arg7[%c0_10, %c0_11], %12 {strides = array<i32>} : memref<64x256xf32, #tpu.memory_space<vmem>>, vector<64x256xf32>,
    } else {
    }
    %c0 = arith.constant 0 : index
    %c0_1 = arith.constant 0 : index
    %3 = vector.load %arg7[%c0, %c0_1] : memref<64x256xf32, #tpu.memory_space<vmem>>, vector<64x256xf32>
    %c0_2 = arith.constant 0 : index
    %c0_3 = arith.constant 0 : index
    %4 = vector.load %arg3[%c0_2, %c0_3] : memref<64x512xf32, #tpu.memory_space<vmem>>, vector<64x512xf32>
    %c0_4 = arith.constant 0 : index
    %c0_5 = arith.constant 0 : index
    %5 = vector.load %arg4[%c0_4, %c0_5] : memref<512x256xf32, #tpu.memory_space<vmem>>, vector<512x256xf32>
    %cst = arith.constant dense<0.000000e+00> : vector<64x256xf32>
    %6 = tpu.matmul %4, %5, %cst {dimension_numbers = #tpu.dot_dimension_numbers<[1], [0], [0], [1], [0, 0, 1, 1], [], []>} : vector<64x512xf32>, vector<512x256xf32>, vector<64x256xf32> -> vector<64x256xf32>
    %7 = arith.addf %3, %6 : vector<64x256xf32>
    %c0_6 = arith.constant 0 : index
    %c0_7 = arith.constant 0 : index
    %8 = vector.load %arg7[%c0_6, %c0_7] : memref<64x256xf32, #tpu.memory_space<vmem>>, vector<64x256xf32>
    tpu.vector_store %arg7[%c0_6, %c0_7], %7 {strides = array<i32>} : memref<64x256xf32, #tpu.memory_space<vmem>>, vector<64x256xf32>,
    %c1_i32 = arith.constant 1 : i32
    %9 = arith.cmpi eq, %arg2, %c1_i32 : i32
    %10 = arith.extui %9 : i1 to i32
    %c0_i32_8 = arith.constant 0 : i32
    %11 = arith.cmpi ne, %10, %c0_i32_8 : i32
    scf.if %11 {
      %c0_9 = arith.constant 0 : index
      %c0_10 = arith.constant 0 : index
      %12 = vector.load %arg7[%c0_9, %c0_10] : memref<64x256xf32, #tpu.memory_space<vmem>>, vector<64x256xf32>
      %c0_11 = arith.constant 0 : index
      %c0_12 = arith.constant 0 : index
      %13 = vector.load %arg5[%c0_11, %c0_12] : memref<1x256xf32, #tpu.memory_space<vmem>>, vector<1x256xf32>
      %14 = vector.broadcast %13 : vector<1x256xf32> to vector<64x256xf32>
      %15 = arith.addf %12, %14 : vector<64x256xf32>
      %c0_13 = arith.constant 0 : index
      %c0_14 = arith.constant 0 : index
      %16 = vector.load %arg6[%c0_13, %c0_14] : memref<64x256xf32, #tpu.memory_space<vmem>>, vector<64x256xf32>
      tpu.vector_store %arg6[%c0_13, %c0_14], %15 {strides = array<i32>} : memref<64x256xf32, #tpu.memory_space<vmem>>, vector<64x256xf32>,
    } else {
    }
    return
  }
  func.func @transform_0(%arg0: i32, %arg1: i32, %arg2: i32) -> (i32, i32) {
    %c0_i32 = arith.constant 0 : i32
    return %arg0, %arg2 : i32, i32
  }
  func.func @transform_1(%arg0: i32, %arg1: i32, %arg2: i32) -> (i32, i32) {
    %c0_i32 = arith.constant 0 : i32
    return %arg2, %arg1 : i32, i32
  }
  func.func @transform_2(%arg0: i32, %arg1: i32, %arg2: i32) -> (i32, i32) {
    %c0_i32 = arith.constant 0 : i32
    %c0_i32_0 = arith.constant 0 : i32
    return %c0_i32, %arg1 : i32, i32
  }
  func.func @transform_3(%arg0: i32, %arg1: i32, %arg2: i32) -> (i32, i32) {
    %c0_i32 = arith.constant 0 : i32
    return %arg0, %arg1 : i32, i32
  }
}

</mosaic_0001>

<llo_original>
// kernel: tpu_custom_call.1
$region0: #{tpu_custom_call.1}
  #allocation0 [shape = 'u32[]', space=smem, size = 0x4, offset = 0x4, fixed_abs, tag = 'smem constant byte address 0x4 - core index']
  #allocation1 [shape = 'u32[72,128]{1,0:T(1,128)}', space=vmem, size = 0x9000, scoped, tag = 'internal scratch']
  #allocation2 [shape = 'f32[64,256]{1,0:T(8,128)}', space=vmem, size = 0x10000, scoped, tag = 'scratch operand']
  %s0 = inlined_call_operand.hbm [shape: f32[64,1024], index: 0, kind: input, shape index: {}]
  %s1 = inlined_call_operand.hbm [shape: f32[1024,256], index: 1, kind: input, shape index: {}]
  %s2 = inlined_call_operand.hbm [shape: f32[1,256], index: 2, kind: input, shape index: {}]
  %s3 = inlined_call_operand.hbm [shape: f32[64,256], index: 3, kind: output, shape index: {}]
  %s4 = sld [smem:[#allocation0]]
  $region65: #{tpu_custom_call.1} parent=0
    _
  %s6 = ssub.s32 1, %s4
  %s7 = scalar_select 0, %s6, %s4
  $region1: #{tpu_custom_call.1} parent=0
    #allocation3 [shape = 'u8[262144]{0}', space=vmem, size = 0x40000, scoped, tag = 'input window, operand 0']
    #allocation4 [shape = 's32[2]{0}', space=sflag, size = 0x8, scoped, tag = 'scoped memory for tpu_custom_call.1']
    #allocation5 [shape = 's32[2]{0}', space=sflag, size = 0x8, scoped, tag = 'scoped memory for tpu_custom_call.1']
    #allocation6 [shape = 'u8[1048576]{0}', space=vmem, size = 0x100000, scoped, tag = 'input window, operand 1']
    #allocation7 [shape = 's32[2]{0}', space=sflag, size = 0x8, scoped, tag = 'scoped memory for tpu_custom_call.1']
    #allocation8 [shape = 'u8[1024]{0}', space=vmem, size = 0x400, scoped, tag = 'input window, operand 2, single buffered']
    #allocation9 [shape = 'u8[65536]{0}', space=vmem, size = 0x10000, scoped, tag = 'output window, operand 0, single buffered']
    %8 = vsyncpa [#allocation4], 0
    %s9 = scalar_lea.sflag [#allocation4], 1
    %10 = vsyncpa %s9, 0
    %11 = vsyncpa [#allocation7], 0
    %s12 = scalar_lea.sflag [#allocation7], 1
    %13 = vsyncpa %s12, 0
    %14 = vsyncpa [#allocation5], 0
    loop: start=0, step=1, limit=4
    $region2: #{tpu_custom_call.1} parent=1 // loop_pre_header
      _
    $region3: #{tpu_custom_call.1} parent=1 // loop_header
      %s16 = sphi 0, %s20
      %p17 = scmp.ge.s32.totalorder %s16, 4
      %s23 = sphi 0, %s42
      %s24 = sphi 0, %s38
      %s25 = sphi 0, %s34
      %s26 = sphi 0, %s23
      %s27 = sphi 0, %s24
      %s28 = sphi 0, %s25
      %s29 = sphi 0, %s26
      %s30 = sphi 0, %s27
      %s31 = sphi 0, %s28
      %s47 = sphi 0, %s49
      %s50 = sphi 0, %s47
      %s51 = sphi 0, %s50
      %s67 = sphi 0, %s51
      %s75 = sphi 0, %s77
      %s78 = sphi 0, %s75
      %s79 = sphi 0, %s78
      %s95 = sphi 0, %s79
      %s101 = sphi 0, %s103
      %s104 = sphi 0, %s101
      %s105 = sphi 0, %s104
      %s121 = sphi 0, %s105
      %s129 = sphi 0, %s131
      %s132 = sphi 0, %s129
      %s133 = sphi 0, %s132
      %s149 = sphi 0, %s133
    $region4: #{tpu_custom_call.1} parent=1 // loop_header_branch
      %19 = sbr.rel (%p17) target = $region8
    $region5: #{tpu_custom_call.1} parent=1 // loop_body
      %s21 = ssub.s32 %s16, 1
      %s22 = ssub.s32 %s16, 2
      %s32 = sadd.s32 1, %s25
      %p33 = scmp.ge.s32.totalorder %s32, 2
      %s34 = scalar_select %p33, 0, %s32
      %s35 = sadd.s32 1, %s24
      %s36 = scalar_select %p33, %s35, %s24
      %p37 = scmp.ge.s32.totalorder %s36, 1
      %s38 = scalar_select %p37, 0, %s36
      %s39 = sadd.s32 1, %s23
      %s40 = scalar_select %p37, %s39, %s23
      %p41 = scmp.ge.s32.totalorder %s40, 1
      %s42 = scalar_select %p41, 0, %s40
      %s43 = ssub.s32 %s23, %s42
      %s44 = ssub.s32 %s25, %s34
      %s45 = sor.u32 %s43, %s44
      %p46 = scmp.eq.s32.totalorder %s45, 0
      %s48 = sadd.s32 %s47, 1
      %s49 = scalar_select %p46, %s47, %s48
      %p52 = pneg %p46
      %p53 = scmp.eq.s32.totalorder %s16, 1
      %p54 = por %p52, %p53
      %p55 = scmp.ne.s32.totalorder %s47, %s50
      %p56 = scmp.eq.s32.totalorder %s16, 0
      %p57 = por %p55, %p56
      %p58 = scmp.ne.s32.totalorder %s47, %s50
      %p59 = scmp.eq.s32.totalorder %s21, 1
      %p60 = por %p58, %p59
      %p61 = scmp.ne.s32.totalorder %s50, %s51
      %p62 = scmp.eq.s32.totalorder %s21, 0
      %p63 = por %p61, %p62
      %p64 = scmp.ne.s32.totalorder %s50, %s51
      %p65 = scmp.eq.s32.totalorder %s22, 1
      %p66 = por %p64, %p65
      %p68 = scmp.ne.s32.totalorder %s51, %s67
      %p69 = scmp.eq.s32.totalorder %s22, 0
      %p70 = por %p68, %p69
      %s71 = ssub.s32 %s25, %s34
      %s72 = ssub.s32 %s24, %s38
      %s73 = sor.u32 %s71, %s72
      %p74 = scmp.eq.s32.totalorder %s73, 0
      %s76 = sadd.s32 %s75, 1
      %s77 = scalar_select %p74, %s75, %s76
      %p80 = pneg %p74
      %p81 = scmp.eq.s32.totalorder %s16, 1
      %p82 = por %p80, %p81
      %p83 = scmp.ne.s32.totalorder %s75, %s78
      %p84 = scmp.eq.s32.totalorder %s16, 0
      %p85 = por %p83, %p84
      %p86 = scmp.ne.s32.totalorder %s75, %s78
      %p87 = scmp.eq.s32.totalorder %s21, 1
      %p88 = por %p86, %p87
      %p89 = scmp.ne.s32.totalorder %s78, %s79
      %p90 = scmp.eq.s32.totalorder %s21, 0
      %p91 = por %p89, %p90
      %p92 = scmp.ne.s32.totalorder %s78, %s79
      %p93 = scmp.eq.s32.totalorder %s22, 1
      %p94 = por %p92, %p93
      %p96 = scmp.ne.s32.totalorder %s79, %s95
      %p97 = scmp.eq.s32.totalorder %s22, 0
      %p98 = por %p96, %p97
      %s99 = ssub.s32 %s24, %s38
      %p100 = scmp.eq.s32.totalorder %s99, 0
      %s102 = sadd.s32 %s101, 1
      %s103 = scalar_select %p100, %s101, %s102
      %p106 = pneg %p100
      %p107 = scmp.eq.s32.totalorder %s16, 1
      %p108 = por %p106, %p107
      %p109 = scmp.ne.s32.totalorder %s101, %s104
      %p110 = scmp.eq.s32.totalorder %s16, 0
      %p111 = por %p109, %p110
      %p112 = scmp.ne.s32.totalorder %s101, %s104
      %p113 = scmp.eq.s32.totalorder %s21, 1
      %p114 = por %p112, %p113
      %p115 = scmp.ne.s32.totalorder %s104, %s105
      %p116 = scmp.eq.s32.totalorder %s21, 0
      %p117 = por %p115, %p116
      %p118 = scmp.ne.s32.totalorder %s104, %s105
      %p119 = scmp.eq.s32.totalorder %s22, 1
      %p120 = por %p118, %p119
      %p122 = scmp.ne.s32.totalorder %s105, %s121
      %p123 = scmp.eq.s32.totalorder %s22, 0
      %p124 = por %p122, %p123
      %s125 = ssub.s32 %s23, %s42
      %s126 = ssub.s32 %s24, %s38
      %s127 = sor.u32 %s125, %s126
      %p128 = scmp.eq.s32.totalorder %s127, 0
      %s130 = sadd.s32 %s129, 1
      %s131 = scalar_select %p128, %s129, %s130
      %p134 = pneg %p128
      %p135 = scmp.eq.s32.totalorder %s16, 1
      %p136 = por %p134, %p135
      %p137 = scmp.ne.s32.totalorder %s129, %s132
      %p138 = scmp.eq.s32.totalorder %s16, 0
      %p139 = por %p137, %p138
      %p140 = scmp.ne.s32.totalorder %s129, %s132
      %p141 = scmp.eq.s32.totalorder %s21, 1
      %p142 = por %p140, %p141
      %p143 = scmp.ne.s32.totalorder %s132, %s133
      %p144 = scmp.eq.s32.totalorder %s21, 0
      %p145 = por %p143, %p144
      %p146 = scmp.ne.s32.totalorder %s132, %s133
      %p147 = scmp.eq.s32.totalorder %s22, 1
      %p148 = por %p146, %p147
      %p150 = scmp.ne.s32.totalorder %s133, %s149
      %p151 = scmp.eq.s32.totalorder %s22, 0
      %p152 = por %p150, %p151
      %p153 = scmp.le.s32.totalorder 1, %s16
      %p154 = scmp.lt.s32.totalorder %s16, 3
      %p155 = pnand %p153, %p154
      %p156 = pneg %p155
      // Predicated region
      $region9: #{tpu_custom_call.1} parent=5 // pred_check
        _
      $region10: #{tpu_custom_call.1} parent=5 // pred_check_branch
        %158 = sbr.rel (%p155) target = $region12
      $region11: #{tpu_custom_call.1} parent=5 // pred_region
        %s159 = ssub.s32 %s16, 1
        // Predicated region
        $region13: #{tpu_custom_call.1} parent=11 // pred_check
          %p160 = pneg %p117
        $region14: #{tpu_custom_call.1} parent=11 // pred_check_branch
          %162 = sbr.rel (%p160) target = $region16
        $region15: #{tpu_custom_call.1} parent=11 // pred_region
          %s163 = smul.u32 2, %s27
          %165 = vsyncadd [#allocation7], 0
          %s166 = scalar_lea.hbm %s2, %s163
          %s168 = sshll.u32 %s166, 4
          %s169 = int_to_ptr.hbm [resolvable:$true] %s168
          %s170 = sshll.u32 [#allocation8], 4
          %s171 = int_to_ptr.vmem [resolvable:$true] %s170
          %173 = dma.hbm_to_vmem [thread:$0]  %s169, 32, %s171, [#allocation7]
        $region16: #{tpu_custom_call.1} parent=11 // pred_fallthru
          _
      $region12: #{tpu_custom_call.1} parent=5 // pred_fallthru
        _
      %p174 = scmp.lt.s32.totalorder %s16, 2
      // Predicated region
      $region17: #{tpu_custom_call.1} parent=5 // pred_check
        %p175 = pneg %p174
      $region18: #{tpu_custom_call.1} parent=5 // pred_check_branch
        %177 = sbr.rel (%p175) target = $region20
      $region19: #{tpu_custom_call.1} parent=5 // pred_region
        // Predicated region
        $region21: #{tpu_custom_call.1} parent=19 // pred_check
          %p178 = pneg %p57
        $region22: #{tpu_custom_call.1} parent=19 // pred_check_branch
          %180 = sbr.rel (%p178) target = $region24
        $region23: #{tpu_custom_call.1} parent=19 // pred_region
          %s181 = sand.u32 %s47, 1
          %s182 = scalar_lea.sflag [#allocation4], %s181
          %s183 = sand.u32 %s47, 1
          %s184 = smul.addr %s183, 256
          %s185 = scalar_lea.vmem [#allocation3], %s184
          %s186 = smul.u32 8, %s23
          %s187 = smul.u32 4, %s25
          %189 = vsyncadd %s182, 0
          %s190 = smul.addr %s186, 8
          %s191 = sadd.s32 %s187, %s190
          %s192 = smul.addr %s191, 8
          %s193 = scalar_lea.hbm %s0, %s192
          %s194 = sshll.u32 %s193, 4
          %s195 = int_to_ptr.hbm [resolvable:$true] %s194
          %s196 = sshll.u32 %s185, 4
          %s197 = int_to_ptr.vmem [resolvable:$true] %s196
          %202 = dma.hbm_to_vmem [thread:$0]  %s195, 4096, %s197, %s182, 1024, 512, 32
        $region24: #{tpu_custom_call.1} parent=19 // pred_fallthru
          _
        // Predicated region
        $region25: #{tpu_custom_call.1} parent=19 // pred_check
          %p203 = pneg %p85
        $region26: #{tpu_custom_call.1} parent=19 // pred_check_branch
          %205 = sbr.rel (%p203) target = $region28
        $region27: #{tpu_custom_call.1} parent=19 // pred_region
          %s206 = sand.u32 %s16, 1
          %s207 = scalar_lea.sflag [#allocation7], %s206
          %s208 = sand.u32 %s75, 1
          %s209 = smul.addr %s208, 1024
          %s210 = scalar_lea.vmem [#allocation6], %s209
          %s211 = smul.u32 64, %s25
          %s212 = smul.u32 2, %s24
          %214 = vsyncadd %s207, 0
          %s215 = smul.addr %s211, 2
          %s216 = sadd.s32 %s212, %s215
          %s217 = smul.addr %s216, 8
          %s218 = scalar_lea.hbm %s1, %s217
          %s219 = sshll.u32 %s218, 4
          %s220 = int_to_ptr.hbm [resolvable:$true] %s219
          %s221 = sshll.u32 %s210, 4
          %s222 = int_to_ptr.vmem [resolvable:$true] %s221
          %227 = dma.hbm_to_vmem [thread:$0]  %s220, 16384, %s222, %s207, 256, 256, 16
        $region28: #{tpu_custom_call.1} parent=19 // pred_fallthru
          _
      $region20: #{tpu_custom_call.1} parent=5 // pred_fallthru
        _
      %p228 = scmp.le.s32.totalorder 1, %s16
      %p229 = scmp.lt.s32.totalorder %s16, 3
      %p230 = pnand %p228, %p229
      %p231 = pneg %p230
      // Predicated region
      $region29: #{tpu_custom_call.1} parent=5 // pred_check
        _
      $region30: #{tpu_custom_call.1} parent=5 // pred_check_branch
        %233 = sbr.rel (%p230) target = $region32
      $region31: #{tpu_custom_call.1} parent=5 // pred_region
        %s234 = ssub.s32 %s16, 1
        %s235 = sand.u32 %s50, 1
        %s236 = scalar_lea.sflag [#allocation4], %s235
        %s237 = sand.u32 %s50, 1
        %s238 = smul.addr %s237, 256
        %s239 = scalar_lea.vmem [#allocation3], %s238
        // Predicated region
        $region33: #{tpu_custom_call.1} parent=31 // pred_check
          %p240 = pneg %p63
        $region34: #{tpu_custom_call.1} parent=31 // pred_check_branch
          %242 = sbr.rel (%p240) target = $region36
        $region35: #{tpu_custom_call.1} parent=31 // pred_region
          %244 = dma.done %s236, 4096
        $region36: #{tpu_custom_call.1} parent=31 // pred_fallthru
          _
        %s245 = sand.u32 %s21, 1
        %s246 = scalar_lea.sflag [#allocation7], %s245
        %s247 = sand.u32 %s78, 1
        %s248 = smul.addr %s247, 1024
        %s249 = scalar_lea.vmem [#allocation6], %s248
        // Predicated region
        $region37: #{tpu_custom_call.1} parent=31 // pred_check
          %p250 = pneg %p91
        $region38: #{tpu_custom_call.1} parent=31 // pred_check_branch
          %252 = sbr.rel (%p250) target = $region40
        $region39: #{tpu_custom_call.1} parent=31 // pred_region
          %254 = dma.done %s246, 16384
        $region40: #{tpu_custom_call.1} parent=31 // pred_fallthru
          _
        // Predicated region
        $region41: #{tpu_custom_call.1} parent=31 // pred_check
          %p255 = pneg %p117
        $region42: #{tpu_custom_call.1} parent=31 // pred_check_branch
          %257 = sbr.rel (%p255) target = $region44
        $region43: #{tpu_custom_call.1} parent=31 // pred_region
          %259 = dma.done [#allocation7], 32
        $region44: #{tpu_custom_call.1} parent=31 // pred_fallthru
          _
        %s260 = sand.u32 %s50, 1
        %s261 = scalar_lea.sflag [#allocation4], %s260
        %s262 = sand.u32 %s50, 1
        %s263 = smul.addr %s262, 256
        %s264 = scalar_lea.vmem [#allocation3], %s263
        %p265 = pneg %p63
        %p266 = pneg %p60
        %s267 = sand.u32 %s21, 1
        %s268 = scalar_lea.sflag [#allocation7], %s267
        %s269 = sand.u32 %s78, 1
        %s270 = smul.addr %s269, 1024
        %s271 = scalar_lea.vmem [#allocation6], %s270
        %p272 = pneg %p91
        %p273 = pneg %p88
        %p274 = pneg %p117
        %p275 = pneg %p114
        %p276 = pneg %p145
        %p277 = pneg %p142
        %s278 = smul.u32 8, %s26
        %s279 = smul.u32 4, %s28
        %s280 = smul.u32 64, %s28
        %s281 = smul.u32 2, %s27
        %s282 = smul.u32 2, %s27
        %s283 = smul.u32 8, %s26
        %s284 = smul.u32 2, %s27
        %p285 = scmp.eq.s32.totalorder %s28, 0
        // Predicated region
        $region45: #{tpu_custom_call.1} parent=31 // pred_check
          %p286 = pneg %p285
        $region46: #{tpu_custom_call.1} parent=31 // pred_check_branch
          %288 = sbr.rel (%p286) target = $region48
        $region47: #{tpu_custom_call.1} parent=31 // pred_region
          %289 = vst [vmem:[#allocation2] sm:$0xff] 0.0
          %290 = vst [vmem:[#allocation2 + $0x8] sm:$0xff] 0.0
          %291 = vst [vmem:[#allocation2 + $0x10] sm:$0xff] 0.0
          %292 = vst [vmem:[#allocation2 + $0x18] sm:$0xff] 0.0
          %293 = vst [vmem:[#allocation2 + $0x20] sm:$0xff] 0.0
          %294 = vst [vmem:[#allocation2 + $0x28] sm:$0xff] 0.0
          %295 = vst [vmem:[#allocation2 + $0x30] sm:$0xff] 0.0
          %296 = vst [vmem:[#allocation2 + $0x38] sm:$0xff] 0.0
          %297 = vst [vmem:[#allocation2 + $0x40] sm:$0xff] 0.0
          %298 = vst [vmem:[#allocation2 + $0x48] sm:$0xff] 0.0
          %299 = vst [vmem:[#allocation2 + $0x50] sm:$0xff] 0.0
          %300 = vst [vmem:[#allocation2 + $0x58] sm:$0xff] 0.0
          %301 = vst [vmem:[#allocation2 + $0x60] sm:$0xff] 0.0
          %302 = vst [vmem:[#allocation2 + $0x68] sm:$0xff] 0.0
          %303 = vst [vmem:[#allocation2 + $0x70] sm:$0xff] 0.0
          %304 = vst [vmem:[#allocation2 + $0x78] sm:$0xff] 0.0
        $region48: #{tpu_custom_call.1} parent=31 // pred_fallthru
          _
        %v305 = vld [vmem:[#allocation2] sm:$0xff]
        %v306 = vld [vmem:[#allocation2 + $0x8] sm:$0xff]
        %v307 = vld [vmem:[#allocation2 + $0x10] sm:$0xff]
        %v308 = vld [vmem:[#allocation2 + $0x18] sm:$0xff]
        %v309 = vld [vmem:[#allocation2 + $0x20] sm:$0xff]
        %v310 = vld [vmem:[#allocation2 + $0x28] sm:$0xff]
        %v311 = vld [vmem:[#allocation2 + $0x30] sm:$0xff]
        %v312 = vld [vmem:[#allocation2 + $0x38] sm:$0xff]
        %v313 = vld [vmem:[#allocation2 + $0x40] sm:$0xff]
        %v314 = vld [vmem:[#allocation2 + $0x48] sm:$0xff]
        %v315 = vld [vmem:[#allocation2 + $0x50] sm:$0xff]
        %v316 = vld [vmem:[#allocation2 + $0x58] sm:$0xff]
        %v317 = vld [vmem:[#allocation2 + $0x60] sm:$0xff]
        %v318 = vld [vmem:[#allocation2 + $0x68] sm:$0xff]
        %v319 = vld [vmem:[#allocation2 + $0x70] sm:$0xff]
        %v320 = vld [vmem:[#allocation2 + $0x78] sm:$0xff]
        %v321 = vld [vmem:[%s239] sm:$0xff]
        %v322 = vld [vmem:[%s239 + $0x8] sm:$0xff]
        %v323 = vld [vmem:[%s239 + $0x10] sm:$0xff]
        %v324 = vld [vmem:[%s239 + $0x18] sm:$0xff]
        %v325 = vld [vmem:[%s239 + $0x20] sm:$0xff]
        %v326 = vld [vmem:[%s239 + $0x28] sm:$0xff]
        %v327 = vld [vmem:[%s239 + $0x30] sm:$0xff]
        %v328 = vld [vmem:[%s239 + $0x38] sm:$0xff]
        %v329 = vld [vmem:[%s239 + $0x40] sm:$0xff]
        %v330 = vld [vmem:[%s239 + $0x48] sm:$0xff]
        %v331 = vld [vmem:[%s239 + $0x50] sm:$0xff]
        %v332 = vld [vmem:[%s239 + $0x58] sm:$0xff]
        %v333 = vld [vmem:[%s239 + $0x60] sm:$0xff]
        %v334 = vld [vmem:[%s239 + $0x68] sm:$0xff]
        %v335 = vld [vmem:[%s239 + $0x70] sm:$0xff]
        %v336 = vld [vmem:[%s239 + $0x78] sm:$0xff]
        %v337 = vld [vmem:[%s239 + $0x80] sm:$0xff]
        %v338 = vld [vmem:[%s239 + $0x88] sm:$0xff]
        %v339 = vld [vmem:[%s239 + $0x90] sm:$0xff]
        %v340 = vld [vmem:[%s239 + $0x98] sm:$0xff]
        %v341 = vld [vmem:[%s239 + $0xa0] sm:$0xff]
        %v342 = vld [vmem:[%s239 + $0xa8] sm:$0xff]
        %v343 = vld [vmem:[%s239 + $0xb0] sm:$0xff]
        %v344 = vld [vmem:[%s239 + $0xb8] sm:$0xff]
        %v345 = vld [vmem:[%s239 + $0xc0] sm:$0xff]
        %v346 = vld [vmem:[%s239 + $0xc8] sm:$0xff]
        %v347 = vld [vmem:[%s239 + $0xd0] sm:$0xff]
        %v348 = vld [vmem:[%s239 + $0xd8] sm:$0xff]
        %v349 = vld [vmem:[%s239 + $0xe0] sm:$0xff]
        %v350 = vld [vmem:[%s239 + $0xe8] sm:$0xff]
        %v351 = vld [vmem:[%s239 + $0xf0] sm:$0xff]
        %v352 = vld [vmem:[%s239 + $0xf8] sm:$0xff]
        %v353 = vld [vmem:[%s249] sm:$0xff]
        %v354 = vld [vmem:[%s249 + $0x8] sm:$0xff]
        %v355 = vld [vmem:[%s249 + $0x10] sm:$0xff]
        %v356 = vld [vmem:[%s249 + $0x18] sm:$0xff]
        %v357 = vld [vmem:[%s249 + $0x20] sm:$0xff]
        %v358 = vld [vmem:[%s249 + $0x28] sm:$0xff]
        %v359 = vld [vmem:[%s249 + $0x30] sm:$0xff]
        %v360 = vld [vmem:[%s249 + $0x38] sm:$0xff]
        %v361 = vld [vmem:[%s249 + $0x40] sm:$0xff]
        %v362 = vld [vmem:[%s249 + $0x48] sm:$0xff]
        %v363 = vld [vmem:[%s249 + $0x50] sm:$0xff]
        %v364 = vld [vmem:[%s249 + $0x58] sm:$0xff]
        %v365 = vld [vmem:[%s249 + $0x60] sm:$0xff]
        %v366 = vld [vmem:[%s249 + $0x68] sm:$0xff]
        %v367 = vld [vmem:[%s249 + $0x70] sm:$0xff]
        %v368 = vld [vmem:[%s249 + $0x78] sm:$0xff]
        %v369 = vld [vmem:[%s249 + $0x80] sm:$0xff]
        %v370 = vld [vmem:[%s249 + $0x88] sm:$0xff]
        %v371 = vld [vmem:[%s249 + $0x90] sm:$0xff]
        %v372 = vld [vmem:[%s249 + $0x98] sm:$0xff]
        %v373 = vld [vmem:[%s249 + $0xa0] sm:$0xff]
        %v374 = vld [vmem:[%s249 + $0xa8] sm:$0xff]
        %v375 = vld [vmem:[%s249 + $0xb0] sm:$0xff]
        %v376 = vld [vmem:[%s249 + $0xb8] sm:$0xff]
        %v377 = vld [vmem:[%s249 + $0xc0] sm:$0xff]
        %v378 = vld [vmem:[%s249 + $0xc8] sm:$0xff]
        %v379 = vld [vmem:[%s249 + $0xd0] sm:$0xff]
        %v380 = vld [vmem:[%s249 + $0xd8] sm:$0xff]
        %v381 = vld [vmem:[%s249 + $0xe0] sm:$0xff]
        %v382 = vld [vmem:[%s249 + $0xe8] sm:$0xff]
        %v383 = vld [vmem:[%s249 + $0xf0] sm:$0xff]
        %v384 = vld [vmem:[%s249 + $0xf8] sm:$0xff]
        %v385 = vld [vmem:[%s249 + $0x100] sm:$0xff]
        %v386 = vld [vmem:[%s249 + $0x108] sm:$0xff]
        %v387 = vld [vmem:[%s249 + $0x110] sm:$0xff]
        %v388 = vld [vmem:[%s249 + $0x118] sm:$0xff]
        %v389 = vld [vmem:[%s249 + $0x120] sm:$0xff]
        %v390 = vld [vmem:[%s249 + $0x128] sm:$0xff]
        %v391 = vld [vmem:[%s249 + $0x130] sm:$0xff]
        %v392 = vld [vmem:[%s249 + $0x138] sm:$0xff]
        %v393 = vld [vmem:[%s249 + $0x140] sm:$0xff]
        %v394 = vld [vmem:[%s249 + $0x148] sm:$0xff]
        %v395 = vld [vmem:[%s249 + $0x150] sm:$0xff]
        %v396 = vld [vmem:[%s249 + $0x158] sm:$0xff]
        %v397 = vld [vmem:[%s249 + $0x160] sm:$0xff]
        %v398 = vld [vmem:[%s249 + $0x168] sm:$0xff]
        %v399 = vld [vmem:[%s249 + $0x170] sm:$0xff]
        %v400 = vld [vmem:[%s249 + $0x178] sm:$0xff]
        %v401 = vld [vmem:[%s249 + $0x180] sm:$0xff]
        %v402 = vld [vmem:[%s249 + $0x188] sm:$0xff]
        %v403 = vld [vmem:[%s249 + $0x190] sm:$0xff]
        %v404 = vld [vmem:[%s249 + $0x198] sm:$0xff]
        %v405 = vld [vmem:[%s249 + $0x1a0] sm:$0xff]
        %v406 = vld [vmem:[%s249 + $0x1a8] sm:$0xff]
        %v407 = vld [vmem:[%s249 + $0x1b0] sm:$0xff]
        %v408 = vld [vmem:[%s249 + $0x1b8] sm:$0xff]
        %v409 = vld [vmem:[%s249 + $0x1c0] sm:$0xff]
        %v410 = vld [vmem:[%s249 + $0x1c8] sm:$0xff]
        %v411 = vld [vmem:[%s249 + $0x1d0] sm:$0xff]
        %v412 = vld [vmem:[%s249 + $0x1d8] sm:$0xff]
        %v413 = vld [vmem:[%s249 + $0x1e0] sm:$0xff]
        %v414 = vld [vmem:[%s249 + $0x1e8] sm:$0xff]
        %v415 = vld [vmem:[%s249 + $0x1f0] sm:$0xff]
        %v416 = vld [vmem:[%s249 + $0x1f8] sm:$0xff]
        %v417 = vld [vmem:[%s249 + $0x200] sm:$0xff]
        %v418 = vld [vmem:[%s249 + $0x208] sm:$0xff]
        %v419 = vld [vmem:[%s249 + $0x210] sm:$0xff]
        %v420 = vld [vmem:[%s249 + $0x218] sm:$0xff]
        %v421 = vld [vmem:[%s249 + $0x220] sm:$0xff]
        %v422 = vld [vmem:[%s249 + $0x228] sm:$0xff]
        %v423 = vld [vmem:[%s249 + $0x230] sm:$0xff]
        %v424 = vld [vmem:[%s249 + $0x238] sm:$0xff]
        %v425 = vld [vmem:[%s249 + $0x240] sm:$0xff]
        %v426 = vld [vmem:[%s249 + $0x248] sm:$0xff]
        %v427 = vld [vmem:[%s249 + $0x250] sm:$0xff]
        %v428 = vld [vmem:[%s249 + $0x258] sm:$0xff]
        %v429 = vld [vmem:[%s249 + $0x260] sm:$0xff]
        %v430 = vld [vmem:[%s249 + $0x268] sm:$0xff]
        %v431 = vld [vmem:[%s249 + $0x270] sm:$0xff]
        %v432 = vld [vmem:[%s249 + $0x278] sm:$0xff]
        %v433 = vld [vmem:[%s249 + $0x280] sm:$0xff]
        %v434 = vld [vmem:[%s249 + $0x288] sm:$0xff]
        %v435 = vld [vmem:[%s249 + $0x290] sm:$0xff]
        %v436 = vld [vmem:[%s249 + $0x298] sm:$0xff]
        %v437 = vld [vmem:[%s249 + $0x2a0] sm:$0xff]
        %v438 = vld [vmem:[%s249 + $0x2a8] sm:$0xff]
        %v439 = vld [vmem:[%s249 + $0x2b0] sm:$0xff]
        %v440 = vld [vmem:[%s249 + $0x2b8] sm:$0xff]
        %v441 = vld [vmem:[%s249 + $0x2c0] sm:$0xff]
        %v442 = vld [vmem:[%s249 + $0x2c8] sm:$0xff]
        %v443 = vld [vmem:[%s249 + $0x2d0] sm:$0xff]
        %v444 = vld [vmem:[%s249 + $0x2d8] sm:$0xff]
        %v445 = vld [vmem:[%s249 + $0x2e0] sm:$0xff]
        %v446 = vld [vmem:[%s249 + $0x2e8] sm:$0xff]
        %v447 = vld [vmem:[%s249 + $0x2f0] sm:$0xff]
        %v448 = vld [vmem:[%s249 + $0x2f8] sm:$0xff]
        %v449 = vld [vmem:[%s249 + $0x300] sm:$0xff]
        %v450 = vld [vmem:[%s249 + $0x308] sm:$0xff]
        %v451 = vld [vmem:[%s249 + $0x310] sm:$0xff]
        %v452 = vld [vmem:[%s249 + $0x318] sm:$0xff]
        %v453 = vld [vmem:[%s249 + $0x320] sm:$0xff]
        %v454 = vld [vmem:[%s249 + $0x328] sm:$0xff]
        %v455 = vld [vmem:[%s249 + $0x330] sm:$0xff]
        %v456 = vld [vmem:[%s249 + $0x338] sm:$0xff]
        %v457 = vld [vmem:[%s249 + $0x340] sm:$0xff]
        %v458 = vld [vmem:[%s249 + $0x348] sm:$0xff]
        %v459 = vld [vmem:[%s249 + $0x350] sm:$0xff]
        %v460 = vld [vmem:[%s249 + $0x358] sm:$0xff]
        %v461 = vld [vmem:[%s249 + $0x360] sm:$0xff]
        %v462 = vld [vmem:[%s249 + $0x368] sm:$0xff]
        %v463 = vld [vmem:[%s249 + $0x370] sm:$0xff]
        %v464 = vld [vmem:[%s249 + $0x378] sm:$0xff]
        %v465 = vld [vmem:[%s249 + $0x380] sm:$0xff]
        %v466 = vld [vmem:[%s249 + $0x388] sm:$0xff]
        %v467 = vld [vmem:[%s249 + $0x390] sm:$0xff]
        %v468 = vld [vmem:[%s249 + $0x398] sm:$0xff]
        %v469 = vld [vmem:[%s249 + $0x3a0] sm:$0xff]
        %v470 = vld [vmem:[%s249 + $0x3a8] sm:$0xff]
        %v471 = vld [vmem:[%s249 + $0x3b0] sm:$0xff]
        %v472 = vld [vmem:[%s249 + $0x3b8] sm:$0xff]
        %v473 = vld [vmem:[%s249 + $0x3c0] sm:$0xff]
        %v474 = vld [vmem:[%s249 + $0x3c8] sm:$0xff]
        %v475 = vld [vmem:[%s249 + $0x3d0] sm:$0xff]
        %v476 = vld [vmem:[%s249 + $0x3d8] sm:$0xff]
        %v477 = vld [vmem:[%s249 + $0x3e0] sm:$0xff]
        %v478 = vld [vmem:[%s249 + $0x3e8] sm:$0xff]
        %v479 = vld [vmem:[%s249 + $0x3f0] sm:$0xff]
        %v480 = vld [vmem:[%s249 + $0x3f8] sm:$0xff]
        %481 = vmatpush.msra.mxu0 %v383
        %482 = vmatpush.msra.mxu0 %v381
        %483 = vmatpush.msra.mxu0 %v379
        %484 = vmatpush.msra.mxu0 %v377
        %485 = vmatpush.msra.mxu0 %v375
        %486 = vmatpush.msra.mxu0 %v373
        %487 = vmatpush.msra.mxu0 %v371
        %488 = vmatpush.msra.mxu0 %v369
        %489 = vmatpush.msra.mxu0 %v367
        %490 = vmatpush.msra.mxu0 %v365
        %491 = vmatpush.msra.mxu0 %v363
        %492 = vmatpush.msra.mxu0 %v361
        %493 = vmatpush.msra.mxu0 %v359
        %494 = vmatpush.msra.mxu0 %v357
        %495 = vmatpush.msra.mxu0 %v355
        %496 = vmatpush.msra.mxu0 %v353
        %497 = vmatmul.f32.gmra.mxu0 %v321
        %v498 = vpop.f32.mrf.mxu0
        %v499 = vadd.f32 0.0, %v498
        %500 = vmatmul.f32.gmra.mxu0 %v325
        %v501 = vpop.f32.mrf.mxu0
        %v502 = vadd.f32 0.0, %v501
        %503 = vmatmul.f32.gmra.mxu0 %v329
        %v504 = vpop.f32.mrf.mxu0
        %v505 = vadd.f32 0.0, %v504
        %506 = vmatmul.f32.gmra.mxu0 %v333
        %v507 = vpop.f32.mrf.mxu0
        %v508 = vadd.f32 0.0, %v507
        %509 = vmatmul.f32.gmra.mxu0 %v337
        %v510 = vpop.f32.mrf.mxu0
        %v511 = vadd.f32 0.0, %v510
        %512 = vmatmul.f32.gmra.mxu0 %v341
        %v513 = vpop.f32.mrf.mxu0
        %v514 = vadd.f32 0.0, %v513
        %515 = vmatmul.f32.gmra.mxu0 %v345
        %v516 = vpop.f32.mrf.mxu0
        %v517 = vadd.f32 0.0, %v516
        %518 = vmatmul.f32.gmra.mxu0 %v349
        %v519 = vpop.f32.mrf.mxu0
        %v520 = vadd.f32 0.0, %v519
        %521 = vdwg.mxu0
        %522 = vmatpush.msra.mxu0 %v415
        %523 = vmatpush.msra.mxu0 %v413
        %524 = vmatpush.msra.mxu0 %v411
        %525 = vmatpush.msra.mxu0 %v409
        %526 = vmatpush.msra.mxu0 %v407
        %527 = vmatpush.msra.mxu0 %v405
        %528 = vmatpush.msra.mxu0 %v403
        %529 = vmatpush.msra.mxu0 %v401
        %530 = vmatpush.msra.mxu0 %v399
        %531 = vmatpush.msra.mxu0 %v397
        %532 = vmatpush.msra.mxu0 %v395
        %533 = vmatpush.msra.mxu0 %v393
        %534 = vmatpush.msra.mxu0 %v391
        %535 = vmatpush.msra.mxu0 %v389
        %536 = vmatpush.msra.mxu0 %v387
        %537 = vmatpush.msra.mxu0 %v385
        %538 = vmatmul.f32.gmra.mxu0 %v322
        %v539 = vpop.f32.mrf.mxu0
        %v540 = vadd.f32 %v499, %v539
        %541 = vmatmul.f32.gmra.mxu0 %v326
        %v542 = vpop.f32.mrf.mxu0
        %v543 = vadd.f32 %v502, %v542
        %544 = vmatmul.f32.gmra.mxu0 %v330
        %v545 = vpop.f32.mrf.mxu0
        %v546 = vadd.f32 %v505, %v545
        %547 = vmatmul.f32.gmra.mxu0 %v334
        %v548 = vpop.f32.mrf.mxu0
        %v549 = vadd.f32 %v508, %v548
        %550 = vmatmul.f32.gmra.mxu0 %v338
        %v551 = vpop.f32.mrf.mxu0
        %v552 = vadd.f32 %v511, %v551
        %553 = vmatmul.f32.gmra.mxu0 %v342
        %v554 = vpop.f32.mrf.mxu0
        %v555 = vadd.f32 %v514, %v554
        %556 = vmatmul.f32.gmra.mxu0 %v346
        %v557 = vpop.f32.mrf.mxu0
        %v558 = vadd.f32 %v517, %v557
        %559 = vmatmul.f32.gmra.mxu0 %v350
        %v560 = vpop.f32.mrf.mxu0
        %v561 = vadd.f32 %v520, %v560
        %562 = vdwg.mxu0
        %563 = vmatpush.msra.mxu0 %v447
        %564 = vmatpush.msra.mxu0 %v445
        %565 = vmatpush.msra.mxu0 %v443
        %566 = vmatpush.msra.mxu0 %v441
        %567 = vmatpush.msra.mxu0 %v439
        %568 = vmatpush.msra.mxu0 %v437
        %569 = vmatpush.msra.mxu0 %v435
        %570 = vmatpush.msra.mxu0 %v433
        %571 = vmatpush.msra.mxu0 %v431
        %572 = vmatpush.msra.mxu0 %v429
        %573 = vmatpush.msra.mxu0 %v427
        %574 = vmatpush.msra.mxu0 %v425
        %575 = vmatpush.msra.mxu0 %v423
        %576 = vmatpush.msra.mxu0 %v421
        %577 = vmatpush.msra.mxu0 %v419
        %578 = vmatpush.msra.mxu0 %v417
        %579 = vmatmul.f32.gmra.mxu0 %v323
        %v580 = vpop.f32.mrf.mxu0
        %v581 = vadd.f32 %v540, %v580
        %582 = vmatmul.f32.gmra.mxu0 %v327
        %v583 = vpop.f32.mrf.mxu0
        %v584 = vadd.f32 %v543, %v583
        %585 = vmatmul.f32.gmra.mxu0 %v331
        %v586 = vpop.f32.mrf.mxu0
        %v587 = vadd.f32 %v546, %v586
        %588 = vmatmul.f32.gmra.mxu0 %v335
        %v589 = vpop.f32.mrf.mxu0
        %v590 = vadd.f32 %v549, %v589
        %591 = vmatmul.f32.gmra.mxu0 %v339
        %v592 = vpop.f32.mrf.mxu0
        %v593 = vadd.f32 %v552, %v592
        %594 = vmatmul.f32.gmra.mxu0 %v343
        %v595 = vpop.f32.mrf.mxu0
        %v596 = vadd.f32 %v555, %v595
        %597 = vmatmul.f32.gmra.mxu0 %v347
        %v598 = vpop.f32.mrf.mxu0
        %v599 = vadd.f32 %v558, %v598
        %600 = vmatmul.f32.gmra.mxu0 %v351
        %v601 = vpop.f32.mrf.mxu0
        %v602 = vadd.f32 %v561, %v601
        %603 = vdwg.mxu0
        %604 = vmatpush.msra.mxu0 %v479
        %605 = vmatpush.msra.mxu0 %v477
        %606 = vmatpush.msra.mxu0 %v475
        %607 = vmatpush.msra.mxu0 %v473
        %608 = vmatpush.msra.mxu0 %v471
        %609 = vmatpush.msra.mxu0 %v469
        %610 = vmatpush.msra.mxu0 %v467
        %611 = vmatpush.msra.mxu0 %v465
        %612 = vmatpush.msra.mxu0 %v463
        %613 = vmatpush.msra.mxu0 %v461
        %614 = vmatpush.msra.mxu0 %v459
        %615 = vmatpush.msra.mxu0 %v457
        %616 = vmatpush.msra.mxu0 %v455
        %617 = vmatpush.msra.mxu0 %v453
        %618 = vmatpush.msra.mxu0 %v451
        %619 = vmatpush.msra.mxu0 %v449
        %620 = vmatmul.f32.gmra.mxu0 %v324
        %v621 = vpop.f32.mrf.mxu0
        %v622 = vadd.f32 %v581, %v621
        %623 = vmatmul.f32.gmra.mxu0 %v328
        %v624 = vpop.f32.mrf.mxu0
        %v625 = vadd.f32 %v584, %v624
        %626 = vmatmul.f32.gmra.mxu0 %v332
        %v627 = vpop.f32.mrf.mxu0
        %v628 = vadd.f32 %v587, %v627
        %629 = vmatmul.f32.gmra.mxu0 %v336
        %v630 = vpop.f32.mrf.mxu0
        %v631 = vadd.f32 %v590, %v630
        %632 = vmatmul.f32.gmra.mxu0 %v340
        %v633 = vpop.f32.mrf.mxu0
        %v634 = vadd.f32 %v593, %v633
        %635 = vmatmul.f32.gmra.mxu0 %v344
        %v636 = vpop.f32.mrf.mxu0
        %v637 = vadd.f32 %v596, %v636
        %638 = vmatmul.f32.gmra.mxu0 %v348
        %v639 = vpop.f32.mrf.mxu0
        %v640 = vadd.f32 %v599, %v639
        %641 = vmatmul.f32.gmra.mxu0 %v352
        %v642 = vpop.f32.mrf.mxu0
        %v643 = vadd.f32 %v602, %v642
        %644 = vdwg.mxu0
        %645 = vmatpush.msra.mxu0 %v384
        %646 = vmatpush.msra.mxu0 %v382
        %647 = vmatpush.msra.mxu0 %v380
        %648 = vmatpush.msra.mxu0 %v378
        %649 = vmatpush.msra.mxu0 %v376
        %650 = vmatpush.msra.mxu0 %v374
        %651 = vmatpush.msra.mxu0 %v372
        %652 = vmatpush.msra.mxu0 %v370
        %653 = vmatpush.msra.mxu0 %v368
        %654 = vmatpush.msra.mxu0 %v366
        %655 = vmatpush.msra.mxu0 %v364
        %656 = vmatpush.msra.mxu0 %v362
        %657 = vmatpush.msra.mxu0 %v360
        %658 = vmatpush.msra.mxu0 %v358
        %659 = vmatpush.msra.mxu0 %v356
        %660 = vmatpush.msra.mxu0 %v354
        %661 = vmatmul.f32.gmra.mxu0 %v321
        %v662 = vpop.f32.mrf.mxu0
        %v663 = vadd.f32 0.0, %v662
        %664 = vmatmul.f32.gmra.mxu0 %v325
        %v665 = vpop.f32.mrf.mxu0
        %v666 = vadd.f32 0.0, %v665
        %667 = vmatmul.f32.gmra.mxu0 %v329
        %v668 = vpop.f32.mrf.mxu0
        %v669 = vadd.f32 0.0, %v668
        %670 = vmatmul.f32.gmra.mxu0 %v333
        %v671 = vpop.f32.mrf.mxu0
        %v672 = vadd.f32 0.0, %v671
        %673 = vmatmul.f32.gmra.mxu0 %v337
        %v674 = vpop.f32.mrf.mxu0
        %v675 = vadd.f32 0.0, %v674
        %676 = vmatmul.f32.gmra.mxu0 %v341
        %v677 = vpop.f32.mrf.mxu0
        %v678 = vadd.f32 0.0, %v677
        %679 = vmatmul.f32.gmra.mxu0 %v345
        %v680 = vpop.f32.mrf.mxu0
        %v681 = vadd.f32 0.0, %v680
        %682 = vmatmul.f32.gmra.mxu0 %v349
        %v683 = vpop.f32.mrf.mxu0
        %v684 = vadd.f32 0.0, %v683
        %685 = vdwg.mxu0
        %686 = vmatpush.msra.mxu0 %v416
        %687 = vmatpush.msra.mxu0 %v414
        %688 = vmatpush.msra.mxu0 %v412
        %689 = vmatpush.msra.mxu0 %v410
        %690 = vmatpush.msra.mxu0 %v408
        %691 = vmatpush.msra.mxu0 %v406
        %692 = vmatpush.msra.mxu0 %v404
        %693 = vmatpush.msra.mxu0 %v402
        %694 = vmatpush.msra.mxu0 %v400
        %695 = vmatpush.msra.mxu0 %v398
        %696 = vmatpush.msra.mxu0 %v396
        %697 = vmatpush.msra.mxu0 %v394
        %698 = vmatpush.msra.mxu0 %v392
        %699 = vmatpush.msra.mxu0 %v390
        %700 = vmatpush.msra.mxu0 %v388
        %701 = vmatpush.msra.mxu0 %v386
        %702 = vmatmul.f32.gmra.mxu0 %v322
        %v703 = vpop.f32.mrf.mxu0
        %v704 = vadd.f32 %v663, %v703
        %705 = vmatmul.f32.gmra.mxu0 %v326
        %v706 = vpop.f32.mrf.mxu0
        %v707 = vadd.f32 %v666, %v706
        %708 = vmatmul.f32.gmra.mxu0 %v330
        %v709 = vpop.f32.mrf.mxu0
        %v710 = vadd.f32 %v669, %v709
        %711 = vmatmul.f32.gmra.mxu0 %v334
        %v712 = vpop.f32.mrf.mxu0
        %v713 = vadd.f32 %v672, %v712
        %714 = vmatmul.f32.gmra.mxu0 %v338
        %v715 = vpop.f32.mrf.mxu0
        %v716 = vadd.f32 %v675, %v715
        %717 = vmatmul.f32.gmra.mxu0 %v342
        %v718 = vpop.f32.mrf.mxu0
        %v719 = vadd.f32 %v678, %v718
        %720 = vmatmul.f32.gmra.mxu0 %v346
        %v721 = vpop.f32.mrf.mxu0
        %v722 = vadd.f32 %v681, %v721
        %723 = vmatmul.f32.gmra.mxu0 %v350
        %v724 = vpop.f32.mrf.mxu0
        %v725 = vadd.f32 %v684, %v724
        %726 = vdwg.mxu0
        %727 = vmatpush.msra.mxu0 %v448
        %728 = vmatpush.msra.mxu0 %v446
        %729 = vmatpush.msra.mxu0 %v444
        %730 = vmatpush.msra.mxu0 %v442
        %731 = vmatpush.msra.mxu0 %v440
        %732 = vmatpush.msra.mxu0 %v438
        %733 = vmatpush.msra.mxu0 %v436
        %734 = vmatpush.msra.mxu0 %v434
        %735 = vmatpush.msra.mxu0 %v432
        %736 = vmatpush.msra.mxu0 %v430
        %737 = vmatpush.msra.mxu0 %v428
        %738 = vmatpush.msra.mxu0 %v426
        %739 = vmatpush.msra.mxu0 %v424
        %740 = vmatpush.msra.mxu0 %v422
        %741 = vmatpush.msra.mxu0 %v420
        %742 = vmatpush.msra.mxu0 %v418
        %743 = vmatmul.f32.gmra.mxu0 %v323
        %v744 = vpop.f32.mrf.mxu0
        %v745 = vadd.f32 %v704, %v744
        %746 = vmatmul.f32.gmra.mxu0 %v327
        %v747 = vpop.f32.mrf.mxu0
        %v748 = vadd.f32 %v707, %v747
        %749 = vmatmul.f32.gmra.mxu0 %v331
        %v750 = vpop.f32.mrf.mxu0
        %v751 = vadd.f32 %v710, %v750
        %752 = vmatmul.f32.gmra.mxu0 %v335
        %v753 = vpop.f32.mrf.mxu0
        %v754 = vadd.f32 %v713, %v753
        %755 = vmatmul.f32.gmra.mxu0 %v339
        %v756 = vpop.f32.mrf.mxu0
        %v757 = vadd.f32 %v716, %v756
        %758 = vmatmul.f32.gmra.mxu0 %v343
        %v759 = vpop.f32.mrf.mxu0
        %v760 = vadd.f32 %v719, %v759
        %761 = vmatmul.f32.gmra.mxu0 %v347
        %v762 = vpop.f32.mrf.mxu0
        %v763 = vadd.f32 %v722, %v762
        %764 = vmatmul.f32.gmra.mxu0 %v351
        %v765 = vpop.f32.mrf.mxu0
        %v766 = vadd.f32 %v725, %v765
        %767 = vdwg.mxu0
        %768 = vmatpush.msra.mxu0 %v480
        %769 = vmatpush.msra.mxu0 %v478
        %770 = vmatpush.msra.mxu0 %v476
        %771 = vmatpush.msra.mxu0 %v474
        %772 = vmatpush.msra.mxu0 %v472
        %773 = vmatpush.msra.mxu0 %v470
        %774 = vmatpush.msra.mxu0 %v468
        %775 = vmatpush.msra.mxu0 %v466
        %776 = vmatpush.msra.mxu0 %v464
        %777 = vmatpush.msra.mxu0 %v462
        %778 = vmatpush.msra.mxu0 %v460
        %779 = vmatpush.msra.mxu0 %v458
        %780 = vmatpush.msra.mxu0 %v456
        %781 = vmatpush.msra.mxu0 %v454
        %782 = vmatpush.msra.mxu0 %v452
        %783 = vmatpush.msra.mxu0 %v450
        %784 = vmatmul.f32.gmra.mxu0 %v324
        %v785 = vpop.f32.mrf.mxu0
        %v786 = vadd.f32 %v745, %v785
        %787 = vmatmul.f32.gmra.mxu0 %v328
        %v788 = vpop.f32.mrf.mxu0
        %v789 = vadd.f32 %v748, %v788
        %790 = vmatmul.f32.gmra.mxu0 %v332
        %v791 = vpop.f32.mrf.mxu0
        %v792 = vadd.f32 %v751, %v791
        %793 = vmatmul.f32.gmra.mxu0 %v336
        %v794 = vpop.f32.mrf.mxu0
        %v795 = vadd.f32 %v754, %v794
        %796 = vmatmul.f32.gmra.mxu0 %v340
        %v797 = vpop.f32.mrf.mxu0
        %v798 = vadd.f32 %v757, %v797
        %799 = vmatmul.f32.gmra.mxu0 %v344
        %v800 = vpop.f32.mrf.mxu0
        %v801 = vadd.f32 %v760, %v800
        %802 = vmatmul.f32.gmra.mxu0 %v348
        %v803 = vpop.f32.mrf.mxu0
        %v804 = vadd.f32 %v763, %v803
        %805 = vmatmul.f32.gmra.mxu0 %v352
        %v806 = vpop.f32.mrf.mxu0
        %v807 = vadd.f32 %v766, %v806
        %808 = vdwg.mxu0
        %v809 = vadd.f32 %v305, %v622
        %v810 = vadd.f32 %v306, %v786
        %v811 = vadd.f32 %v307, %v625
        %v812 = vadd.f32 %v308, %v789
        %v813 = vadd.f32 %v309, %v628
        %v814 = vadd.f32 %v310, %v792
        %v815 = vadd.f32 %v311, %v631
        %v816 = vadd.f32 %v312, %v795
        %v817 = vadd.f32 %v313, %v634
        %v818 = vadd.f32 %v314, %v798
        %v819 = vadd.f32 %v315, %v637
        %v820 = vadd.f32 %v316, %v801
        %v821 = vadd.f32 %v317, %v640
        %v822 = vadd.f32 %v318, %v804
        %v823 = vadd.f32 %v319, %v643
        %v824 = vadd.f32 %v320, %v807
        %825 = vst [vmem:[#allocation2] sm:$0xff] %v809
        %826 = vst [vmem:[#allocation2 + $0x8] sm:$0xff] %v810
        %827 = vst [vmem:[#allocation2 + $0x10] sm:$0xff] %v811
        %828 = vst [vmem:[#allocation2 + $0x18] sm:$0xff] %v812
        %829 = vst [vmem:[#allocation2 + $0x20] sm:$0xff] %v813
        %830 = vst [vmem:[#allocation2 + $0x28] sm:$0xff] %v814
        %831 = vst [vmem:[#allocation2 + $0x30] sm:$0xff] %v815
        %832 = vst [vmem:[#allocation2 + $0x38] sm:$0xff] %v816
        %833 = vst [vmem:[#allocation2 + $0x40] sm:$0xff] %v817
        %834 = vst [vmem:[#allocation2 + $0x48] sm:$0xff] %v818
        %835 = vst [vmem:[#allocation2 + $0x50] sm:$0xff] %v819
        %836 = vst [vmem:[#allocation2 + $0x58] sm:$0xff] %v820
        %837 = vst [vmem:[#allocation2 + $0x60] sm:$0xff] %v821
        %838 = vst [vmem:[#allocation2 + $0x68] sm:$0xff] %v822
        %839 = vst [vmem:[#allocation2 + $0x70] sm:$0xff] %v823
        %840 = vst [vmem:[#allocation2 + $0x78] sm:$0xff] %v824
        %p841 = scmp.eq.s32.totalorder %s28, 1
        // Predicated region
        $region49: #{tpu_custom_call.1} parent=31 // pred_check
          %p842 = pneg %p841
        $region50: #{tpu_custom_call.1} parent=31 // pred_check_branch
          %844 = sbr.rel (%p842) target = $region52
        $region51: #{tpu_custom_call.1} parent=31 // pred_region
          %v845 = vld [vmem:[#allocation2] sm:$0xff]
          %v846 = vld [vmem:[#allocation2 + $0x8] sm:$0xff]
          %v847 = vld [vmem:[#allocation2 + $0x10] sm:$0xff]
          %v848 = vld [vmem:[#allocation2 + $0x18] sm:$0xff]
          %v849 = vld [vmem:[#allocation2 + $0x20] sm:$0xff]
          %v850 = vld [vmem:[#allocation2 + $0x28] sm:$0xff]
          %v851 = vld [vmem:[#allocation2 + $0x30] sm:$0xff]
          %v852 = vld [vmem:[#allocation2 + $0x38] sm:$0xff]
          %v853 = vld [vmem:[#allocation2 + $0x40] sm:$0xff]
          %v854 = vld [vmem:[#allocation2 + $0x48] sm:$0xff]
          %v855 = vld [vmem:[#allocation2 + $0x50] sm:$0xff]
          %v856 = vld [vmem:[#allocation2 + $0x58] sm:$0xff]
          %v857 = vld [vmem:[#allocation2 + $0x60] sm:$0xff]
          %v858 = vld [vmem:[#allocation2 + $0x68] sm:$0xff]
          %v859 = vld [vmem:[#allocation2 + $0x70] sm:$0xff]
          %v860 = vld [vmem:[#allocation2 + $0x78] sm:$0xff]
          %v861 = vld [vmem:[#allocation8] sm:$0x3]
          %v863 = vperm.slane %v861, 0
          %v864 = vperm.slane %v861, 1
          %v867 = vadd.f32 %v845, %v863
          %v868 = vadd.f32 %v846, %v864
          %v869 = vadd.f32 %v847, %v863
          %v870 = vadd.f32 %v848, %v864
          %v871 = vadd.f32 %v849, %v863
          %v872 = vadd.f32 %v850, %v864
          %v873 = vadd.f32 %v851, %v863
          %v874 = vadd.f32 %v852, %v864
          %v875 = vadd.f32 %v853, %v863
          %v876 = vadd.f32 %v854, %v864
          %v877 = vadd.f32 %v855, %v863
          %v878 = vadd.f32 %v856, %v864
          %v879 = vadd.f32 %v857, %v863
          %v880 = vadd.f32 %v858, %v864
          %v881 = vadd.f32 %v859, %v863
          %v882 = vadd.f32 %v860, %v864
          %883 = vst [vmem:[#allocation9] sm:$0xff] %v867
          %884 = vst [vmem:[#allocation9 + $0x8] sm:$0xff] %v868
          %885 = vst [vmem:[#allocation9 + $0x10] sm:$0xff] %v869
          %886 = vst [vmem:[#allocation9 + $0x18] sm:$0xff] %v870
          %887 = vst [vmem:[#allocation9 + $0x20] sm:$0xff] %v871
          %888 = vst [vmem:[#allocation9 + $0x28] sm:$0xff] %v872
          %889 = vst [vmem:[#allocation9 + $0x30] sm:$0xff] %v873
          %890 = vst [vmem:[#allocation9 + $0x38] sm:$0xff] %v874
          %891 = vst [vmem:[#allocation9 + $0x40] sm:$0xff] %v875
          %892 = vst [vmem:[#allocation9 + $0x48] sm:$0xff] %v876
          %893 = vst [vmem:[#allocation9 + $0x50] sm:$0xff] %v877
          %894 = vst [vmem:[#allocation9 + $0x58] sm:$0xff] %v878
          %895 = vst [vmem:[#allocation9 + $0x60] sm:$0xff] %v879
          %896 = vst [vmem:[#allocation9 + $0x68] sm:$0xff] %v880
          %897 = vst [vmem:[#allocation9 + $0x70] sm:$0xff] %v881
          %898 = vst [vmem:[#allocation9 + $0x78] sm:$0xff] %v882
        $region52: #{tpu_custom_call.1} parent=31 // pred_fallthru
          _
        // Predicated region
        $region53: #{tpu_custom_call.1} parent=31 // pred_check
          %p899 = pneg %p142
        $region54: #{tpu_custom_call.1} parent=31 // pred_check_branch
          %901 = sbr.rel (%p899) target = $region56
        $region55: #{tpu_custom_call.1} parent=31 // pred_region
          %s902 = smul.u32 8, %s26
          %s903 = smul.u32 2, %s27
          %905 = vsyncadd [#allocation5], 0
          %s906 = smul.addr %s902, 2
          %s907 = sadd.s32 %s903, %s906
          %s908 = smul.addr %s907, 8
          %s909 = scalar_lea.hbm %s3, %s908
          %s910 = sshll.u32 [#allocation9], 4
          %s911 = int_to_ptr.vmem [resolvable:$true] %s910
          %s912 = sshll.u32 %s909, 4
          %s913 = int_to_ptr.hbm [resolvable:$true] %s912
          %918 = dma.vmem_to_hbm [thread:$0]  %s911, 2048, %s913, [#allocation5], 256, 256, 16
        $region56: #{tpu_custom_call.1} parent=31 // pred_fallthru
          _
        // Predicated region
        $region57: #{tpu_custom_call.1} parent=31 // pred_check
          %p919 = pneg %p142
        $region58: #{tpu_custom_call.1} parent=31 // pred_check_branch
          %921 = sbr.rel (%p919) target = $region60
        $region59: #{tpu_custom_call.1} parent=31 // pred_region
          %923 = dma.done [#allocation5], 2048
        $region60: #{tpu_custom_call.1} parent=31 // pred_fallthru
          _
      $region32: #{tpu_custom_call.1} parent=5 // pred_fallthru
        _
      %p924 = scmp.le.s32.totalorder 2, %s16
      // Predicated region
      $region61: #{tpu_custom_call.1} parent=5 // pred_check
        %p925 = pneg %p924
      $region62: #{tpu_custom_call.1} parent=5 // pred_check_branch
        %927 = sbr.rel (%p925) target = $region64
      $region63: #{tpu_custom_call.1} parent=5 // pred_region
        %s928 = ssub.s32 %s16, 2
      $region64: #{tpu_custom_call.1} parent=5 // pred_fallthru
        _
    $region6: #{tpu_custom_call.1} parent=1 // loop_footer
      %s20 = sadd.s32 1, %s16
    $region7: #{tpu_custom_call.1} parent=1 // loop_footer_branch
      %15 = sbr.rel target = $region3
    $region8: #{tpu_custom_call.1} parent=1 // loop_exit
      _
    %929 = vsyncpa [#allocation4], 1
    %s930 = scalar_lea.sflag [#allocation4], 1
    %931 = vsyncpa %s930, 1
    %932 = vsyncpa [#allocation7], 1
    %s933 = scalar_lea.sflag [#allocation7], 1
    %934 = vsyncpa %s933, 1
    %935 = vsyncpa [#allocation5], 1
    %s936 = scalar_lea.sflag [#allocation5], 1
    %937 = vsyncpa %s936, 1

</llo_original>
